<compile_context>
chip_gen: v6e
topology: v6e:2x2x1
jax: 0.10.0
libtpu: 0.0.40
codegen_flags: <defaults>
</compile_context>

<pallas_src>
import functools

import jax
import jax.numpy as jnp
from jax.experimental import pallas as pl
from jax.experimental.pallas import tpu as pltpu

_LANE = 128
_ROW = 16  # bf16 packs 2 rows per sublane -> 16-row minimum tiles


def _round_up(x, m):
    return (x + m - 1) // m * m


def _pick_tile(dim_p, pref, align):
    """Largest multiple of `align` that divides dim_p and is <= pref.

    dim_p must already be a multiple of `align`."""
    if dim_p <= pref:
        return dim_p
    t = (pref // align) * align
    while t > align and dim_p % t != 0:
        t -= align
    return max(t, align)


# ------------------------- tiled linear (MXU) kernel -------------------------

def _linear_kernel(x_ref, w_ref, b_ref, o_ref, acc_ref):
    k = pl.program_id(2)

    @pl.when(k == 0)
    def _():
        acc_ref[...] = jnp.zeros_like(acc_ref)

    acc_ref[...] += jnp.dot(x_ref[...], w_ref[...],
                            preferred_element_type=jnp.float32)

    @pl.when(k == pl.num_programs(2) - 1)
    def _():
        o_ref[...] = (acc_ref[...] + b_ref[...]).astype(o_ref.dtype)


class PackedLinear:
    """Weight/bias pre-packed once: bf16, zero-padded to 128-aligned tiles."""

    def __init__(self, w, b):
        K, N = w.shape
        Kp, Np = _round_up(K, _LANE), _round_up(N, _LANE)
        self.K, self.N = K, N
        self.wp = jnp.pad(w.astype(jnp.bfloat16), ((0, Kp - K), (0, Np - N)))
        self.bp = jnp.pad(b.astype(jnp.float32), (0, Np - N)).reshape(1, Np)


def linear_pallas(x, packed, *, out_dtype=jnp.float32, tm=256, tn=512, tk=512):
    """out = x @ w + b with pre-packed (padded, bf16) weights.

    x:(M,K) any float dtype -> (M, packed.N) out_dtype.  f32 VMEM accumulator,
    K is the trailing reduction axis, tiles chosen to divide padded dims."""
    M, K = x.shape
    assert K == packed.K, (K, packed.K)
    Kp, Np = packed.wp.shape
    Mp = _round_up(M, _ROW)
    tm = _pick_tile(Mp, tm, _ROW)
    tn = _pick_tile(Np, tn, _LANE)
    tk = _pick_tile(Kp, tk, _LANE)

    xp = jnp.pad(x.astype(jnp.bfloat16), ((0, Mp - M), (0, Kp - K)))

    out = pl.pallas_call(
        _linear_kernel,
        out_shape=jax.ShapeDtypeStruct((Mp, Np), out_dtype),
        grid_spec=pltpu.PrefetchScalarGridSpec(
            num_scalar_prefetch=0,
            grid=(Mp // tm, Np // tn, Kp // tk),
            in_specs=[
                pl.BlockSpec((tm, tk), lambda i, j, k: (i, k)),
                pl.BlockSpec((tk, tn), lambda i, j, k: (k, j)),
                pl.BlockSpec((1, tn), lambda i, j, k: (0, j)),
            ],
            out_specs=pl.BlockSpec((tm, tn), lambda i, j, k: (i, j)),
            scratch_shapes=[pltpu.VMEM((tm, tn), jnp.float32)],
        ),
        compiler_params=pltpu.CompilerParams(
            dimension_semantics=("parallel", "parallel", "arbitrary")),
    )(xp, packed.wp, packed.bp)
    return out[:M, :packed.N]


# --------------------- recurrent kernels (grid over (B-tiles, T)) -------------
# gx_ref holds the precomputed x @ W_ih + (b_ih + b_hh) for ONE timestep
# (double-buffered by BlockSpec); h/c carry lives in VMEM scratch and is
# re-initialized whenever t == 0 (i.e. for every batch tile).

def _lstm_step_kernel(gx_ref, whh_ref, o_ref, h_ref, c_ref, *, hidden):
    t = pl.program_id(1)

    @pl.when(t == 0)
    def _():
        h_ref[...] = jnp.zeros_like(h_ref)
        c_ref[...] = jnp.zeros_like(c_ref)

    Hp = hidden
    gates = gx_ref[0].astype(jnp.float32) + jnp.dot(
        h_ref[...].astype(jnp.bfloat16), whh_ref[...],
        preferred_element_type=jnp.float32)
    # PyTorch gate order i, f, g, o; slices are lane-aligned (Hp % 128 == 0).
    i = jax.nn.sigmoid(gates[:, 0 * Hp:1 * Hp])
    f = jax.nn.sigmoid(gates[:, 1 * Hp:2 * Hp])
    g = jnp.tanh(gates[:, 2 * Hp:3 * Hp])
    o = jax.nn.sigmoid(gates[:, 3 * Hp:4 * Hp])
    c_new = f * c_ref[...] + i * g
    h_new = o * jnp.tanh(c_new)
    c_ref[...] = c_new
    h_ref[...] = h_new
    o_ref[0] = h_new.astype(o_ref.dtype)


def _rnn_step_kernel(gx_ref, whh_ref, o_ref, h_ref, *, hidden):
    t = pl.program_id(1)

    @pl.when(t == 0)
    def _():
        h_ref[...] = jnp.zeros_like(h_ref)

    pre = gx_ref[0].astype(jnp.float32) + jnp.dot(
        h_ref[...].astype(jnp.bfloat16), whh_ref[...],
        preferred_element_type=jnp.float32)
    h_new = jnp.tanh(pre)
    h_ref[...] = h_new
    o_ref[0] = h_new.astype(o_ref.dtype)


def _pack_rnn_weights(w_ih, w_hh, b_ih, b_hh, hidden, din_x, gates):
    """Repack PyTorch (gates*H, Din)/(gates*H, H) weights into lane-aligned,
    transposed layouts with the hidden dim padded to a multiple of 128.

    Padded gate columns get zero weight/bias, padded hidden input rows get zero
    weight, so the padded lanes of h/c stay exactly zero (h/c start at zero) ->
    no semantic change.  Returns (PackedLinear for the hoisted x@W_ih+bias,
    bf16 (Hp, gates*Hp) W_hh)."""
    H = hidden
    Hp = _round_up(H, _LANE)
    din_w = w_ih.shape[1]

    w_ih3 = jnp.pad(w_ih.reshape(gates, H, din_w),
                    ((0, 0), (0, Hp - H), (0, din_x - din_w)))
    wih_t = jnp.transpose(w_ih3, (2, 0, 1)).reshape(din_x, gates * Hp)

    w_hh3 = jnp.pad(w_hh.reshape(gates, H, H),
                    ((0, 0), (0, Hp - H), (0, Hp - H)))
    whh_t = jnp.transpose(w_hh3, (2, 0, 1)).reshape(Hp, gates * Hp)

    b2 = jnp.pad((b_ih + b_hh).reshape(gates, H),
                 ((0, 0), (0, Hp - H))).reshape(gates * Hp)
    return PackedLinear(wih_t, b2), whh_t.astype(jnp.bfloat16)


def _recurrent_layer_pallas(x_tbf, layer_packed, hidden, *, cell):
    """x_tbf: (T, Bp, Din) with Bp a multiple of 16.
    Returns (T, Bp, Hp) bf16 with Hp = hidden rounded up to 128."""
    T, Bp, Din = x_tbf.shape
    Hp = _round_up(hidden, _LANE)
    gates = 4 if cell == 'LSTM' else 1
    gx_packed, whh = layer_packed

    # Hoisted input projection: one big MXU matmul for all timesteps (bf16 out).
    gates_x = linear_pallas(x_tbf.reshape(T * Bp, Din), gx_packed,
                            out_dtype=jnp.bfloat16)
    gates_x = gates_x.reshape(T, Bp, gates * Hp)

    Bt = _pick_tile(Bp, 256, _ROW)
    if cell == 'LSTM':
        kernel = functools.partial(_lstm_step_kernel, hidden=Hp)
        scratch = [pltpu.VMEM((Bt, Hp), jnp.float32),
                   pltpu.VMEM((Bt, Hp), jnp.float32)]
    else:
        kernel = functools.partial(_rnn_step_kernel, hidden=Hp)
        scratch = [pltpu.VMEM((Bt, Hp), jnp.float32)]

    return pl.pallas_call(
        kernel,
        out_shape=jax.ShapeDtypeStruct((T, Bp, Hp), jnp.bfloat16),
        grid_spec=pltpu.PrefetchScalarGridSpec(
            num_scalar_prefetch=0,
            grid=(Bp // Bt, T),
            in_specs=[
                pl.BlockSpec((1, Bt, gates * Hp), lambda b, t: (t, b, 0)),
                pl.BlockSpec((Hp, gates * Hp), lambda b, t: (0, 0)),
            ],
            out_specs=pl.BlockSpec((1, Bt, Hp), lambda b, t: (t, b, 0)),
            scratch_shapes=scratch,
        ),
        compiler_params=pltpu.CompilerParams(
            dimension_semantics=("parallel", "arbitrary")),
    )(gates_x, whh)


# ------------------------------ model wrapper --------------------------------

class CaptionModel:
    RESNET_FEAT = 2048  # resnet50.fc.in_features

    def __init__(self, model_type, embedding_size, hidden_size, vocab_size,
                 num_layer=2, image_shape=(3, 16, 16), key=None):
        self.model_type = model_type
        self.embedding_size = embedding_size
        self.hidden_size = hidden_size
        self.vocab_size = vocab_size
        self.num_layer = num_layer
        self.image_shape = image_shape
        self.Hp = _round_up(hidden_size, _LANE)

        key = jax.random.PRNGKey(0) if key is None else key
        ks = iter(jax.random.split(key, 32))
        flat = int(image_shape[0] * image_shape[1] * image_shape[2])

        def init(shape, scale=0.05):
            return (scale * jax.random.normal(next(ks), shape)).astype(jnp.float32)

        # TODO(synk): pretrained frozen ResNet-50 backbone is not reproducible
        # in-script; approximated by a linear projection of the flattened NCHW
        # pixels to the 2048-d feature the real backbone emits.  Since the
        # backbone is frozen, that projection and the replaced fc layer are
        # pre-multiplied into ONE packed linear at init.
        proj_w = init((flat, self.RESNET_FEAT))
        proj_b = init((self.RESNET_FEAT,))
        fc_w = init((self.RESNET_FEAT, embedding_size))
        fc_b = init((embedding_size,))
        backbone_w = proj_w @ fc_w                       # (flat, E)
        backbone_b = proj_b @ fc_w + fc_b                # (E,)
        self.backbone = PackedLinear(backbone_w, backbone_b)

        # nn.Embedding(vocab_size, embedding_size)
        self.embedding = init((vocab_size, embedding_size), scale=0.1)

        # recurrent network (weights packed once at init)
        if model_type in ('LSTM', 'RNN'):
            din0 = embedding_size
        else:                         # ARCH2: nn.LSTM(embedding_size * 2, ...)
            din0 = embedding_size * 2
        gate_mult = 1 if model_type == 'RNN' else 4
        self.rnn_packed = []
        for l in range(num_layer):
            din_raw = din0 if l == 0 else hidden_size    # PyTorch weight layout
            din_x = din0 if l == 0 else self.Hp          # padded layer input dim
            w_ih = init((gate_mult * hidden_size, din_raw))
            w_hh = init((gate_mult * hidden_size, hidden_size))
            b_ih = init((gate_mult * hidden_size,))
            b_hh = init((gate_mult * hidden_size,))
            self.rnn_packed.append(
                _pack_rnn_weights(w_ih, w_hh, b_ih, b_hh,
                                  hidden_size, din_x, gate_mult))

        # nn.Linear(hidden_size, vocab_size)
        self.out_proj = PackedLinear(init((hidden_size, vocab_size)),
                                     init((vocab_size,)))

    def forward(self, image, caption):
        """image: (B, C, H, W) f32, caption: (B, T) int32 -> (B*T, vocab)."""
        B = image.shape[0]
        flat = image.reshape(B, -1).astype(jnp.float32)

        # Fused ResNet-50 stand-in + replaced fc layer (one tiled Pallas matmul)
        feature = linear_pallas(flat, self.backbone)               # (B, E)

        embed_caption = jnp.take(self.embedding, caption, axis=0)  # (B, T, E)

        if self.model_type in ('LSTM', 'RNN'):
            embed_input = jnp.concatenate(
                [feature[:, None, :], embed_caption[:, :-1, :]], axis=1)   # (B,T,E)
        else:  # ARCH2
            pad_ids = jnp.zeros((B, 1), dtype=jnp.int32)
            pad = jnp.take(self.embedding, pad_ids, axis=0)                # (B,1,E)
            embed_caption = jnp.concatenate(
                [pad, embed_caption[:, :-1, :]], axis=1)                   # (B,T,E)
            feat_rep = jnp.repeat(feature[:, None, :],
                                  embed_caption.shape[1], axis=1)
            embed_input = jnp.concatenate([feat_rep, embed_caption], axis=2)

        T = embed_input.shape[1]
        Bp = _round_up(B, _ROW)                          # 16-row bf16 packing
        x = jnp.transpose(embed_input, (1, 0, 2))        # (T, B, Din)
        x = jnp.pad(x, ((0, 0), (0, Bp - B), (0, 0)))    # (T, Bp, Din)

        cell = 'RNN' if self.model_type == 'RNN' else 'LSTM'
        for l in range(self.num_layer):
            x = _recurrent_layer_pallas(x, self.rnn_packed[l],
                                        self.hidden_size, cell=cell)
            # x stays padded bf16: (T, Bp, Hp); padded lanes are exactly zero.

        h = x[:, :B, :self.hidden_size]                                # (T,B,H) bf16
        h = jnp.transpose(h, (1, 0, 2)).reshape(-1, self.hidden_size)  # (B*T, H)
        out = linear_pallas(h, self.out_proj)                          # (B*T, V) f32
        return out


# ---------------------------------- main -------------------------------------

if __name__ == "__main__":
    key = jax.random.PRNGKey(0)
    k_img, k_cap, k_param = jax.random.split(key, 3)

    B, C, Himg, Wimg = 2, 3, 16, 16
    T = 8
    embedding_size, hidden_size, vocab_size = 32, 32, 48

    image = jax.random.normal(k_img, (B, C, Himg, Wimg), dtype=jnp.float32)
    caption = jax.random.randint(k_cap, (B, T), 0, vocab_size, dtype=jnp.int32)

    m = CaptionModel('LSTM', embedding_size, hidden_size, vocab_size,
                     num_layer=2, image_shape=(C, Himg, Wimg), key=k_param)
    out = m.forward(image, caption)
    out = jax.block_until_ready(out)
    assert out.shape == (B * T, vocab_size), out.shape

    print("KERNEL_OK")
</pallas_src>

<mosaic_0001>
module attributes {stable_mosaic.version = 11 : i64} {
  func.func @_linear_kernel(%arg0: i32, %arg1: i32, %arg2: i32, %arg3: memref<16x384xbf16, #tpu.memory_space<vmem>>, %arg4: memref<384x128xbf16, #tpu.memory_space<vmem>>, %arg5: memref<1x128xf32, #tpu.memory_space<vmem>>, %arg6: memref<16x128xf32, #tpu.memory_space<vmem>>, %arg7: memref<16x128xf32, #tpu.memory_space<vmem>>) attributes {dimension_semantics = [#tpu.dimension_semantics<parallel>, #tpu.dimension_semantics<parallel>, #tpu.dimension_semantics<arbitrary>], iteration_bounds = array<i64: 1, 1, 2>, scalar_prefetch = 0 : i64, scratch_operands = 1 : i64, tpu.core_type = #tpu.core_type<tc>, window_params = [{transform_indices = @transform_0, window_bounds = array<i64: 16, 384>}, {transform_indices = @transform_1, window_bounds = array<i64: 384, 128>}, {transform_indices = @transform_2, window_bounds = array<i64: 1, 128>}, {transform_indices = @transform_3, window_bounds = array<i64: 16, 128>}]} {
    %c0_i32 = arith.constant 0 : i32
    %0 = arith.cmpi eq, %arg2, %c0_i32 : i32
    %1 = arith.extui %0 : i1 to i32
    %c0_i32_0 = arith.constant 0 : i32
    %2 = arith.cmpi ne, %1, %c0_i32_0 : i32
    scf.if %2 {
      %cst_9 = arith.constant 0.000000e+00 : f32
      %12 = vector.broadcast %cst_9 : f32 to vector<16x128xf32>
      %c0_10 = arith.constant 0 : index
      %c0_11 = arith.constant 0 : index
      %13 = vector.load %arg7[%c0_10, %c0_11] : memref<16x128xf32, #tpu.memory_space<vmem>>, vector<16x128xf32>
      tpu.vector_store %arg7[%c0_10, %c0_11], %12 {strides = array<i32>} : memref<16x128xf32, #tpu.memory_space<vmem>>, vector<16x128xf32>,
    } else {
    }
    %c0 = arith.constant 0 : index
    %c0_1 = arith.constant 0 : index
    %3 = vector.load %arg7[%c0, %c0_1] : memref<16x128xf32, #tpu.memory_space<vmem>>, vector<16x128xf32>
    %c0_2 = arith.constant 0 : index
    %c0_3 = arith.constant 0 : index
    %4 = vector.load %arg3[%c0_2, %c0_3] : memref<16x384xbf16, #tpu.memory_space<vmem>>, vector<16x384xbf16>
    %c0_4 = arith.constant 0 : index
    %c0_5 = arith.constant 0 : index
    %5 = vector.load %arg4[%c0_4, %c0_5] : memref<384x128xbf16, #tpu.memory_space<vmem>>, vector<384x128xbf16>
    %cst = arith.constant dense<0.000000e+00> : vector<16x128xf32>
    %6 = tpu.matmul %4, %5, %cst {dimension_numbers = #tpu.dot_dimension_numbers<[1], [0], [0], [1], [0, 0, 1, 1], [], []>} : vector<16x384xbf16>, vector<384x128xbf16>, vector<16x128xf32> -> vector<16x128xf32>
    %7 = arith.addf %3, %6 : vector<16x128xf32>
    %c0_6 = arith.constant 0 : index
    %c0_7 = arith.constant 0 : index
    %8 = vector.load %arg7[%c0_6, %c0_7] : memref<16x128xf32, #tpu.memory_space<vmem>>, vector<16x128xf32>
    tpu.vector_store %arg7[%c0_6, %c0_7], %7 {strides = array<i32>} : memref<16x128xf32, #tpu.memory_space<vmem>>, vector<16x128xf32>,
    %c1_i32 = arith.constant 1 : i32
    %9 = arith.cmpi eq, %arg2, %c1_i32 : i32
    %10 = arith.extui %9 : i1 to i32
    %c0_i32_8 = arith.constant 0 : i32
    %11 = arith.cmpi ne, %10, %c0_i32_8 : i32
    scf.if %11 {
      %c0_9 = arith.constant 0 : index
      %c0_10 = arith.constant 0 : index
      %12 = vector.load %arg7[%c0_9, %c0_10] : memref<16x128xf32, #tpu.memory_space<vmem>>, vector<16x128xf32>
      %c0_11 = arith.constant 0 : index
      %c0_12 = arith.constant 0 : index
      %13 = vector.load %arg5[%c0_11, %c0_12] : memref<1x128xf32, #tpu.memory_space<vmem>>, vector<1x128xf32>
      %14 = vector.broadcast %13 : vector<1x128xf32> to vector<16x128xf32>
      %15 = arith.addf %12, %14 : vector<16x128xf32>
      %c0_13 = arith.constant 0 : index
      %c0_14 = arith.constant 0 : index
      %16 = vector.load %arg6[%c0_13, %c0_14] : memref<16x128xf32, #tpu.memory_space<vmem>>, vector<16x128xf32>
      tpu.vector_store %arg6[%c0_13, %c0_14], %15 {strides = array<i32>} : memref<16x128xf32, #tpu.memory_space<vmem>>, vector<16x128xf32>,
    } else {
    }
    return
  }
  func.func @transform_0(%arg0: i32, %arg1: i32, %arg2: i32) -> (i32, i32) {
    %c0_i32 = arith.constant 0 : i32
    return %arg0, %arg2 : i32, i32
  }
  func.func @transform_1(%arg0: i32, %arg1: i32, %arg2: i32) -> (i32, i32) {
    %c0_i32 = arith.constant 0 : i32
    return %arg2, %arg1 : i32, i32
  }
  func.func @transform_2(%arg0: i32, %arg1: i32, %arg2: i32) -> (i32, i32) {
    %c0_i32 = arith.constant 0 : i32
    %c0_i32_0 = arith.constant 0 : i32
    return %c0_i32, %arg1 : i32, i32
  }
  func.func @transform_3(%arg0: i32, %arg1: i32, %arg2: i32) -> (i32, i32) {
    %c0_i32 = arith.constant 0 : i32
    return %arg0, %arg1 : i32, i32
  }
}

</mosaic_0001>

<llo_original>
// kernel: tpu_custom_call.1
$region0: #{tpu_custom_call.1}
  #allocation0 [shape = 'u32[]', space=smem, size = 0x4, offset = 0x4, fixed_abs, tag = 'smem constant byte address 0x4 - core index']
  #allocation1 [shape = 'u32[144,128]{1,0:T(1,128)}', space=vmem, size = 0x12000, scoped, tag = 'internal scratch']
  #allocation2 [shape = 'f32[16,128]{1,0:T(8,128)}', space=vmem, size = 0x2000, scoped, tag = 'scratch operand']
  %s0 = inlined_call_operand.hbm [shape: bf16[16,768], index: 0, kind: input, shape index: {}]
  %s1 = inlined_call_operand.hbm [shape: bf16[768,128], index: 1, kind: input, shape index: {}]
  %s2 = inlined_call_operand.vmem [shape: f32[1,128], index: 2, kind: input, shape index: {}]
  %s3 = inlined_call_operand.hbm [shape: f32[16,128], index: 3, kind: output, shape index: {}]
  %s4 = sld [smem:[#allocation0]]
  $region61: #{tpu_custom_call.1} parent=0
    _
  %s6 = ssub.s32 1, %s4
  %s7 = scalar_select 0, %s6, %s4
  $region1: #{tpu_custom_call.1} parent=0
    #allocation3 [shape = 'u8[24576]{0}', space=vmem, size = 0x6000, scoped, tag = 'input window, operand 0']
    #allocation4 [shape = 's32[2]{0}', space=sflag, size = 0x8, scoped, tag = 'scoped memory for tpu_custom_call.1']
    #allocation5 [shape = 's32[2]{0}', space=sflag, size = 0x8, scoped, tag = 'scoped memory for tpu_custom_call.1']
    #allocation6 [shape = 'u8[196608]{0}', space=vmem, size = 0x30000, scoped, tag = 'input window, operand 1']
    #allocation7 [shape = 's32[2]{0}', space=sflag, size = 0x8, scoped, tag = 'scoped memory for tpu_custom_call.1']
    #allocation8 [shape = 'u8[8192]{0}', space=vmem, size = 0x2000, scoped, tag = 'output window, operand 0, single buffered']
    %8 = vsyncpa [#allocation4], 0
    %s9 = scalar_lea.sflag [#allocation4], 1
    %10 = vsyncpa %s9, 0
    %11 = vsyncpa [#allocation7], 0
    %s12 = scalar_lea.sflag [#allocation7], 1
    %13 = vsyncpa %s12, 0
    %14 = vsyncpa [#allocation5], 0
    loop: start=0, step=1, limit=4
    $region2: #{tpu_custom_call.1} parent=1 // loop_pre_header
      _
    $region3: #{tpu_custom_call.1} parent=1 // loop_header
      %s16 = sphi 0, %s20
      %p17 = scmp.ge.s32.totalorder %s16, 4
      %s23 = sphi 0, %s42
      %s24 = sphi 0, %s38
      %s25 = sphi 0, %s34
      %s26 = sphi 0, %s23
      %s27 = sphi 0, %s24
      %s28 = sphi 0, %s25
      %s29 = sphi 0, %s26
      %s30 = sphi 0, %s27
      %s31 = sphi 0, %s28
      %s47 = sphi 0, %s49
      %s50 = sphi 0, %s47
      %s51 = sphi 0, %s50
      %s67 = sphi 0, %s51
      %s75 = sphi 0, %s77
      %s78 = sphi 0, %s75
      %s79 = sphi 0, %s78
      %s95 = sphi 0, %s79
      %s101 = sphi 0, %s103
      %s104 = sphi 0, %s101
      %s105 = sphi 0, %s104
      %s121 = sphi 0, %s105
      %s129 = sphi 0, %s131
      %s132 = sphi 0, %s129
      %s133 = sphi 0, %s132
      %s149 = sphi 0, %s133
    $region4: #{tpu_custom_call.1} parent=1 // loop_header_branch
      %19 = sbr.rel (%p17) target = $region8
    $region5: #{tpu_custom_call.1} parent=1 // loop_body
      %s21 = ssub.s32 %s16, 1
      %s22 = ssub.s32 %s16, 2
      %s32 = sadd.s32 1, %s25
      %p33 = scmp.ge.s32.totalorder %s32, 2
      %s34 = scalar_select %p33, 0, %s32
      %s35 = sadd.s32 1, %s24
      %s36 = scalar_select %p33, %s35, %s24
      %p37 = scmp.ge.s32.totalorder %s36, 1
      %s38 = scalar_select %p37, 0, %s36
      %s39 = sadd.s32 1, %s23
      %s40 = scalar_select %p37, %s39, %s23
      %p41 = scmp.ge.s32.totalorder %s40, 1
      %s42 = scalar_select %p41, 0, %s40
      %s43 = ssub.s32 %s23, %s42
      %s44 = ssub.s32 %s25, %s34
      %s45 = sor.u32 %s43, %s44
      %p46 = scmp.eq.s32.totalorder %s45, 0
      %s48 = sadd.s32 %s47, 1
      %s49 = scalar_select %p46, %s47, %s48
      %p52 = pneg %p46
      %p53 = scmp.eq.s32.totalorder %s16, 1
      %p54 = por %p52, %p53
      %p55 = scmp.ne.s32.totalorder %s47, %s50
      %p56 = scmp.eq.s32.totalorder %s16, 0
      %p57 = por %p55, %p56
      %p58 = scmp.ne.s32.totalorder %s47, %s50
      %p59 = scmp.eq.s32.totalorder %s21, 1
      %p60 = por %p58, %p59
      %p61 = scmp.ne.s32.totalorder %s50, %s51
      %p62 = scmp.eq.s32.totalorder %s21, 0
      %p63 = por %p61, %p62
      %p64 = scmp.ne.s32.totalorder %s50, %s51
      %p65 = scmp.eq.s32.totalorder %s22, 1
      %p66 = por %p64, %p65
      %p68 = scmp.ne.s32.totalorder %s51, %s67
      %p69 = scmp.eq.s32.totalorder %s22, 0
      %p70 = por %p68, %p69
      %s71 = ssub.s32 %s25, %s34
      %s72 = ssub.s32 %s24, %s38
      %s73 = sor.u32 %s71, %s72
      %p74 = scmp.eq.s32.totalorder %s73, 0
      %s76 = sadd.s32 %s75, 1
      %s77 = scalar_select %p74, %s75, %s76
      %p80 = pneg %p74
      %p81 = scmp.eq.s32.totalorder %s16, 1
      %p82 = por %p80, %p81
      %p83 = scmp.ne.s32.totalorder %s75, %s78
      %p84 = scmp.eq.s32.totalorder %s16, 0
      %p85 = por %p83, %p84
      %p86 = scmp.ne.s32.totalorder %s75, %s78
      %p87 = scmp.eq.s32.totalorder %s21, 1
      %p88 = por %p86, %p87
      %p89 = scmp.ne.s32.totalorder %s78, %s79
      %p90 = scmp.eq.s32.totalorder %s21, 0
      %p91 = por %p89, %p90
      %p92 = scmp.ne.s32.totalorder %s78, %s79
      %p93 = scmp.eq.s32.totalorder %s22, 1
      %p94 = por %p92, %p93
      %p96 = scmp.ne.s32.totalorder %s79, %s95
      %p97 = scmp.eq.s32.totalorder %s22, 0
      %p98 = por %p96, %p97
      %s99 = ssub.s32 %s24, %s38
      %p100 = scmp.eq.s32.totalorder %s99, 0
      %s102 = sadd.s32 %s101, 1
      %s103 = scalar_select %p100, %s101, %s102
      %p106 = pneg %p100
      %p107 = scmp.eq.s32.totalorder %s16, 1
      %p108 = por %p106, %p107
      %p109 = scmp.ne.s32.totalorder %s101, %s104
      %p110 = scmp.eq.s32.totalorder %s16, 0
      %p111 = por %p109, %p110
      %p112 = scmp.ne.s32.totalorder %s101, %s104
      %p113 = scmp.eq.s32.totalorder %s21, 1
      %p114 = por %p112, %p113
      %p115 = scmp.ne.s32.totalorder %s104, %s105
      %p116 = scmp.eq.s32.totalorder %s21, 0
      %p117 = por %p115, %p116
      %p118 = scmp.ne.s32.totalorder %s104, %s105
      %p119 = scmp.eq.s32.totalorder %s22, 1
      %p120 = por %p118, %p119
      %p122 = scmp.ne.s32.totalorder %s105, %s121
      %p123 = scmp.eq.s32.totalorder %s22, 0
      %p124 = por %p122, %p123
      %s125 = ssub.s32 %s23, %s42
      %s126 = ssub.s32 %s24, %s38
      %s127 = sor.u32 %s125, %s126
      %p128 = scmp.eq.s32.totalorder %s127, 0
      %s130 = sadd.s32 %s129, 1
      %s131 = scalar_select %p128, %s129, %s130
      %p134 = pneg %p128
      %p135 = scmp.eq.s32.totalorder %s16, 1
      %p136 = por %p134, %p135
      %p137 = scmp.ne.s32.totalorder %s129, %s132
      %p138 = scmp.eq.s32.totalorder %s16, 0
      %p139 = por %p137, %p138
      %p140 = scmp.ne.s32.totalorder %s129, %s132
      %p141 = scmp.eq.s32.totalorder %s21, 1
      %p142 = por %p140, %p141
      %p143 = scmp.ne.s32.totalorder %s132, %s133
      %p144 = scmp.eq.s32.totalorder %s21, 0
      %p145 = por %p143, %p144
      %p146 = scmp.ne.s32.totalorder %s132, %s133
      %p147 = scmp.eq.s32.totalorder %s22, 1
      %p148 = por %p146, %p147
      %p150 = scmp.ne.s32.totalorder %s133, %s149
      %p151 = scmp.eq.s32.totalorder %s22, 0
      %p152 = por %p150, %p151
      %p153 = scmp.le.s32.totalorder 1, %s16
      %p154 = scmp.lt.s32.totalorder %s16, 3
      %p155 = pnand %p153, %p154
      %p156 = pneg %p155
      // Predicated region
      $region9: #{tpu_custom_call.1} parent=5 // pred_check
        _
      $region10: #{tpu_custom_call.1} parent=5 // pred_check_branch
        %158 = sbr.rel (%p155) target = $region12
      $region11: #{tpu_custom_call.1} parent=5 // pred_region
        %s159 = ssub.s32 %s16, 1
        // Predicated region
        $region13: #{tpu_custom_call.1} parent=11 // pred_check
          %p160 = pneg %p117
        $region14: #{tpu_custom_call.1} parent=11 // pred_check_branch
          %162 = sbr.rel (%p160) target = $region16
        $region15: #{tpu_custom_call.1} parent=11 // pred_region
          %p163 = scmp.lt.s32.totalorder %s27, 0
          %s164 = scalar_select %p163, %s27, 0
          %s165 = scalar_lea.vmem %s2, %s164
        $region16: #{tpu_custom_call.1} parent=11 // pred_fallthru
          _
      $region12: #{tpu_custom_call.1} parent=5 // pred_fallthru
        _
      %p166 = scmp.lt.s32.totalorder %s16, 2
      // Predicated region
      $region17: #{tpu_custom_call.1} parent=5 // pred_check
        %p167 = pneg %p166
      $region18: #{tpu_custom_call.1} parent=5 // pred_check_branch
        %169 = sbr.rel (%p167) target = $region20
      $region19: #{tpu_custom_call.1} parent=5 // pred_region
        // Predicated region
        $region21: #{tpu_custom_call.1} parent=19 // pred_check
          %p170 = pneg %p57
        $region22: #{tpu_custom_call.1} parent=19 // pred_check_branch
          %172 = sbr.rel (%p170) target = $region24
        $region23: #{tpu_custom_call.1} parent=19 // pred_region
          %s173 = sand.u32 %s47, 1
          %s174 = scalar_lea.sflag [#allocation4], %s173
          %s175 = sand.u32 %s47, 1
          %s176 = smul.addr %s175, 24
          %s177 = scalar_lea.vmem [#allocation3], %s176
          %s178 = smul.u32 2, %s23
          %s179 = smul.u32 3, %s25
          %s181 = ssub.s32 384, 384
          %182 = vsyncadd %s174, %s181
          %s183 = smul.addr %s178, 6
          %s184 = sadd.s32 %s179, %s183
          %s185 = smul.addr %s184, 64
          %s186 = scalar_lea.hbm %s0, %s185
          %s187 = sshll.u32 %s177, 4
          %s188 = int_to_ptr.vmem [resolvable:$true] %s187
          %193 = dma.hbm_to_vmem [thread:$0]  %s186, 384, %s188, %s174, 384, 192, 12
        $region24: #{tpu_custom_call.1} parent=19 // pred_fallthru
          _
        // Predicated region
        $region25: #{tpu_custom_call.1} parent=19 // pred_check
          %p194 = pneg %p85
        $region26: #{tpu_custom_call.1} parent=19 // pred_check_branch
          %196 = sbr.rel (%p194) target = $region28
        $region27: #{tpu_custom_call.1} parent=19 // pred_region
          %s197 = sand.u32 %s75, 1
          %s198 = scalar_lea.sflag [#allocation7], %s197
          %s199 = sand.u32 %s75, 1
          %s200 = smul.addr %s199, 192
          %s201 = scalar_lea.vmem [#allocation6], %s200
          %s202 = smul.u32 48, %s25
          %s204 = ssub.s32 3072, 3072
          %205 = vsyncadd %s198, %s204
          %s206 = sadd.s32 %s24, %s202
          %s207 = smul.addr %s206, 64
          %s208 = scalar_lea.hbm %s1, %s207
          %s209 = sshll.u32 %s201, 4
          %s210 = int_to_ptr.vmem [resolvable:$true] %s209
          %215 = dma.hbm_to_vmem [thread:$0]  %s208, 3072, %s210, %s198, 64, 64, 4
        $region28: #{tpu_custom_call.1} parent=19 // pred_fallthru
          _
      $region20: #{tpu_custom_call.1} parent=5 // pred_fallthru
        _
      %p216 = scmp.le.s32.totalorder 1, %s16
      %p217 = scmp.lt.s32.totalorder %s16, 3
      %p218 = pnand %p216, %p217
      %p219 = pneg %p218
      // Predicated region
      $region29: #{tpu_custom_call.1} parent=5 // pred_check
        _
      $region30: #{tpu_custom_call.1} parent=5 // pred_check_branch
        %221 = sbr.rel (%p218) target = $region32
      $region31: #{tpu_custom_call.1} parent=5 // pred_region
        %s222 = ssub.s32 %s16, 1
        %s223 = sand.u32 %s50, 1
        %s224 = scalar_lea.sflag [#allocation4], %s223
        %s225 = sand.u32 %s50, 1
        %s226 = smul.addr %s225, 24
        %s227 = scalar_lea.vmem [#allocation3], %s226
        // Predicated region
        $region33: #{tpu_custom_call.1} parent=31 // pred_check
          %p228 = pneg %p63
        $region34: #{tpu_custom_call.1} parent=31 // pred_check_branch
          %230 = sbr.rel (%p228) target = $region36
        $region35: #{tpu_custom_call.1} parent=31 // pred_region
          %231 = dma.done %s224, 384
        $region36: #{tpu_custom_call.1} parent=31 // pred_fallthru
          _
        %s232 = sand.u32 %s78, 1
        %s233 = scalar_lea.sflag [#allocation7], %s232
        %s234 = sand.u32 %s78, 1
        %s235 = smul.addr %s234, 192
        %s236 = scalar_lea.vmem [#allocation6], %s235
        // Predicated region
        $region37: #{tpu_custom_call.1} parent=31 // pred_check
          %p237 = pneg %p91
        $region38: #{tpu_custom_call.1} parent=31 // pred_check_branch
          %239 = sbr.rel (%p237) target = $region40
        $region39: #{tpu_custom_call.1} parent=31 // pred_region
          %240 = dma.done %s233, 3072
        $region40: #{tpu_custom_call.1} parent=31 // pred_fallthru
          _
        %s241 = sand.u32 %s50, 1
        %s242 = scalar_lea.sflag [#allocation4], %s241
        %s243 = sand.u32 %s50, 1
        %s244 = smul.addr %s243, 24
        %s245 = scalar_lea.vmem [#allocation3], %s244
        %p246 = pneg %p63
        %p247 = pneg %p60
        %s248 = sand.u32 %s78, 1
        %s249 = scalar_lea.sflag [#allocation7], %s248
        %s250 = sand.u32 %s78, 1
        %s251 = smul.addr %s250, 192
        %s252 = scalar_lea.vmem [#allocation6], %s251
        %p253 = pneg %p91
        %p254 = pneg %p88
        %p255 = scmp.lt.s32.totalorder %s27, 0
        %s256 = scalar_select %p255, %s27, 0
        %s257 = scalar_lea.vmem %s2, %s256
        %p258 = pneg %p117
        %p259 = pneg %p114
        %p260 = pneg %p145
        %p261 = pneg %p142
        %s262 = smul.u32 2, %s26
        %s263 = smul.u32 3, %s28
        %s264 = smul.u32 48, %s28
        %p265 = scmp.lt.s32.totalorder %s27, 0
        %s266 = scalar_select %p265, %s27, 0
        %s267 = scalar_lea.vmem %s2, %s266
        %s268 = smul.u32 2, %s26
        %p270 = scmp.eq.s32.totalorder %s28, 0
        // Predicated region
        $region41: #{tpu_custom_call.1} parent=31 // pred_check
          %p271 = pneg %p270
        $region42: #{tpu_custom_call.1} parent=31 // pred_check_branch
          %273 = sbr.rel (%p271) target = $region44
        $region43: #{tpu_custom_call.1} parent=31 // pred_region
          %274 = vst [vmem:[#allocation2] sm:$0xff] 0.0
          %275 = vst [vmem:[#allocation2 + $0x8] sm:$0xff] 0.0
        $region44: #{tpu_custom_call.1} parent=31 // pred_fallthru
          _
        %v276 = vld [vmem:[#allocation2] sm:$0xff]
        %v277 = vld [vmem:[#allocation2 + $0x8] sm:$0xff]
        %v278 = vld [vmem:[%s227] sm:$0xff]
        %v279 = vld [vmem:[%s227 + $0x8] sm:$0xf]
        %v280 = vld [vmem:[%s227 + $0xc] sm:$0xff]
        %v281 = vld [vmem:[%s227 + $0x14] sm:$0xf]
        %v282 = vld [vmem:[%s236] sm:$0xf]
        %v283 = vld [vmem:[%s236 + $0x4] sm:$0xf]
        %v284 = vld [vmem:[%s236 + $0x8] sm:$0xf]
        %v285 = vld [vmem:[%s236 + $0xc] sm:$0xf]
        %v286 = vld [vmem:[%s236 + $0x10] sm:$0xf]
        %v287 = vld [vmem:[%s236 + $0x14] sm:$0xf]
        %v288 = vld [vmem:[%s236 + $0x18] sm:$0xf]
        %v289 = vld [vmem:[%s236 + $0x1c] sm:$0xf]
        %v290 = vld [vmem:[%s236 + $0x20] sm:$0xf]
        %v291 = vld [vmem:[%s236 + $0x24] sm:$0xf]
        %v292 = vld [vmem:[%s236 + $0x28] sm:$0xf]
        %v293 = vld [vmem:[%s236 + $0x2c] sm:$0xf]
        %v294 = vld [vmem:[%s236 + $0x30] sm:$0xf]
        %v295 = vld [vmem:[%s236 + $0x34] sm:$0xf]
        %v296 = vld [vmem:[%s236 + $0x38] sm:$0xf]
        %v297 = vld [vmem:[%s236 + $0x3c] sm:$0xf]
        %v298 = vld [vmem:[%s236 + $0x40] sm:$0xf]
        %v299 = vld [vmem:[%s236 + $0x44] sm:$0xf]
        %v300 = vld [vmem:[%s236 + $0x48] sm:$0xf]
        %v301 = vld [vmem:[%s236 + $0x4c] sm:$0xf]
        %v302 = vld [vmem:[%s236 + $0x50] sm:$0xf]
        %v303 = vld [vmem:[%s236 + $0x54] sm:$0xf]
        %v304 = vld [vmem:[%s236 + $0x58] sm:$0xf]
        %v305 = vld [vmem:[%s236 + $0x5c] sm:$0xf]
        %v306 = vld [vmem:[%s236 + $0x60] sm:$0xf]
        %v307 = vld [vmem:[%s236 + $0x64] sm:$0xf]
        %v308 = vld [vmem:[%s236 + $0x68] sm:$0xf]
        %v309 = vld [vmem:[%s236 + $0x6c] sm:$0xf]
        %v310 = vld [vmem:[%s236 + $0x70] sm:$0xf]
        %v311 = vld [vmem:[%s236 + $0x74] sm:$0xf]
        %v312 = vld [vmem:[%s236 + $0x78] sm:$0xf]
        %v313 = vld [vmem:[%s236 + $0x7c] sm:$0xf]
        %v314 = vld [vmem:[%s236 + $0x80] sm:$0xf]
        %v315 = vld [vmem:[%s236 + $0x84] sm:$0xf]
        %v316 = vld [vmem:[%s236 + $0x88] sm:$0xf]
        %v317 = vld [vmem:[%s236 + $0x8c] sm:$0xf]
        %v318 = vld [vmem:[%s236 + $0x90] sm:$0xf]
        %v319 = vld [vmem:[%s236 + $0x94] sm:$0xf]
        %v320 = vld [vmem:[%s236 + $0x98] sm:$0xf]
        %v321 = vld [vmem:[%s236 + $0x9c] sm:$0xf]
        %v322 = vld [vmem:[%s236 + $0xa0] sm:$0xf]
        %v323 = vld [vmem:[%s236 + $0xa4] sm:$0xf]
        %v324 = vld [vmem:[%s236 + $0xa8] sm:$0xf]
        %v325 = vld [vmem:[%s236 + $0xac] sm:$0xf]
        %v326 = vld [vmem:[%s236 + $0xb0] sm:$0xf]
        %v327 = vld [vmem:[%s236 + $0xb4] sm:$0xf]
        %v328 = vld [vmem:[%s236 + $0xb8] sm:$0xf]
        %v329 = vld [vmem:[%s236 + $0xbc] sm:$0xf]
        %v334 = vunpack.c.l.b16 %v278
        %v335 = vunpack.c.h.b16 %v278
        %v336 = vunpack.c.l.b16 %v279
        %v337 = vunpack.c.l.b16 %v280
        %v338 = vunpack.c.h.b16 %v280
        %v339 = vunpack.c.l.b16 %v281
        %v340 = vpack.c.b16 %v337, %v334
        %v341 = vpack.c.b16 %v338, %v335
        %v342 = vpack.c.b16 %v339, %v336
        %v394 = vunpack.c.l.b16 %v282
        %v395 = vunpack.c.l.b16 %v283
        %v396 = vunpack.c.l.b16 %v284
        %v397 = vunpack.c.l.b16 %v285
        %v398 = vunpack.c.l.b16 %v286
        %v399 = vunpack.c.l.b16 %v287
        %v400 = vunpack.c.l.b16 %v288
        %v401 = vunpack.c.l.b16 %v289
        %v402 = vunpack.c.l.b16 %v290
        %v403 = vunpack.c.l.b16 %v291
        %v404 = vunpack.c.l.b16 %v292
        %v405 = vunpack.c.l.b16 %v293
        %v406 = vunpack.c.l.b16 %v294
        %v407 = vunpack.c.l.b16 %v295
        %v408 = vunpack.c.l.b16 %v296
        %v409 = vunpack.c.l.b16 %v297
        %v410 = vunpack.c.l.b16 %v298
        %v411 = vunpack.c.l.b16 %v299
        %v412 = vunpack.c.l.b16 %v300
        %v413 = vunpack.c.l.b16 %v301
        %v414 = vunpack.c.l.b16 %v302
        %v415 = vunpack.c.l.b16 %v303
        %v416 = vunpack.c.l.b16 %v304
        %v417 = vunpack.c.l.b16 %v305
        %v418 = vunpack.c.l.b16 %v306
        %v419 = vunpack.c.l.b16 %v307
        %v420 = vunpack.c.l.b16 %v308
        %v421 = vunpack.c.l.b16 %v309
        %v422 = vunpack.c.l.b16 %v310
        %v423 = vunpack.c.l.b16 %v311
        %v424 = vunpack.c.l.b16 %v312
        %v425 = vunpack.c.l.b16 %v313
        %v426 = vunpack.c.l.b16 %v314
        %v427 = vunpack.c.l.b16 %v315
        %v428 = vunpack.c.l.b16 %v316
        %v429 = vunpack.c.l.b16 %v317
        %v430 = vunpack.c.l.b16 %v318
        %v431 = vunpack.c.l.b16 %v319
        %v432 = vunpack.c.l.b16 %v320
        %v433 = vunpack.c.l.b16 %v321
        %v434 = vunpack.c.l.b16 %v322
        %v435 = vunpack.c.l.b16 %v323
        %v436 = vunpack.c.l.b16 %v324
        %v437 = vunpack.c.l.b16 %v325
        %v438 = vunpack.c.l.b16 %v326
        %v439 = vunpack.c.l.b16 %v327
        %v440 = vunpack.c.l.b16 %v328
        %v441 = vunpack.c.l.b16 %v329
        %v442 = vpack.c.b16 %v395, %v394
        %v443 = vpack.c.b16 %v397, %v396
        %v444 = vpack.c.b16 %v399, %v398
        %v445 = vpack.c.b16 %v401, %v400
        %v446 = vpack.c.b16 %v403, %v402
        %v447 = vpack.c.b16 %v405, %v404
        %v448 = vpack.c.b16 %v407, %v406
        %v449 = vpack.c.b16 %v409, %v408
        %v450 = vpack.c.b16 %v411, %v410
        %v451 = vpack.c.b16 %v413, %v412
        %v452 = vpack.c.b16 %v415, %v414
        %v453 = vpack.c.b16 %v417, %v416
        %v454 = vpack.c.b16 %v419, %v418
        %v455 = vpack.c.b16 %v421, %v420
        %v456 = vpack.c.b16 %v423, %v422
        %v457 = vpack.c.b16 %v425, %v424
        %v458 = vpack.c.b16 %v427, %v426
        %v459 = vpack.c.b16 %v429, %v428
        %v460 = vpack.c.b16 %v431, %v430
        %v461 = vpack.c.b16 %v433, %v432
        %v462 = vpack.c.b16 %v435, %v434
        %v463 = vpack.c.b16 %v437, %v436
        %v464 = vpack.c.b16 %v439, %v438
        %v465 = vpack.c.b16 %v441, %v440
        %490 = vmatprep.subr.bf16.mxu0 0
        %491 = vmatpush1.bf16.msra.mxu0 %v449
        %492 = vmatprep.subr.bf16.mxu0 0
        %493 = vmatpush1.bf16.msra.mxu0 %v448
        %494 = vmatprep.subr.bf16.mxu0 0
        %495 = vmatpush1.bf16.msra.mxu0 %v447
        %496 = vmatprep.subr.bf16.mxu0 0
        %497 = vmatpush1.bf16.msra.mxu0 %v446
        %498 = vmatprep.subr.bf16.mxu0 0
        %499 = vmatpush1.bf16.msra.mxu0 %v445
        %500 = vmatprep.subr.bf16.mxu0 0
        %501 = vmatpush1.bf16.msra.mxu0 %v444
        %502 = vmatprep.subr.bf16.mxu0 0
        %503 = vmatpush1.bf16.msra.mxu0 %v443
        %504 = vmatprep.subr.bf16.mxu0 0
        %505 = vmatpush1.bf16.msra.mxu0 %v442
        %506 = vmatprep.subr.bf16.mxu0 0
        %507 = vmatpush2.bf16.msra.mxu0 %v457
        %508 = vmatprep.subr.bf16.mxu0 0
        %509 = vmatpush2.bf16.msra.mxu0 %v456
        %510 = vmatprep.subr.bf16.mxu0 0
        %511 = vmatpush2.bf16.msra.mxu0 %v455
        %512 = vmatprep.subr.bf16.mxu0 0
        %513 = vmatpush2.bf16.msra.mxu0 %v454
        %514 = vmatprep.subr.bf16.mxu0 0
        %515 = vmatpush2.bf16.msra.mxu0 %v453
        %516 = vmatprep.subr.bf16.mxu0 0
        %517 = vmatpush2.bf16.msra.mxu0 %v452
        %518 = vmatprep.subr.bf16.mxu0 0
        %519 = vmatpush2.bf16.msra.mxu0 %v451
        %520 = vmatprep.subr.bf16.mxu0 0
        %521 = vmatpush2.bf16.msra.mxu0 %v450
        %522 = vmatprep.mubr.bf16.mxu0 %v341
        %523 = vmatmul.mubr.bf16.gmra.mxu0 %v340
        %v524 = vpop.f32.mrf.mxu0
        %v525 = vadd.f32 0.0, %v524
        %v526 = vpop.f32.mrf.mxu0
        %v527 = vpop.f32.mrf.mxu0
        %v528 = vadd.f32 0.0, %v527
        %v529 = vpop.f32.mrf.mxu0
        %530 = vdwg.mxu0
        %531 = vmatprep.subr.bf16.mxu0 0
        %532 = vmatpush1.bf16.msra.mxu0 %v465
        %533 = vmatprep.subr.bf16.mxu0 0
        %534 = vmatpush1.bf16.msra.mxu0 %v464
        %535 = vmatprep.subr.bf16.mxu0 0
        %536 = vmatpush1.bf16.msra.mxu0 %v463
        %537 = vmatprep.subr.bf16.mxu0 0
        %538 = vmatpush1.bf16.msra.mxu0 %v462
        %539 = vmatprep.subr.bf16.mxu0 0
        %540 = vmatpush1.bf16.msra.mxu0 %v461
        %541 = vmatprep.subr.bf16.mxu0 0
        %542 = vmatpush1.bf16.msra.mxu0 %v460
        %543 = vmatprep.subr.bf16.mxu0 0
        %544 = vmatpush1.bf16.msra.mxu0 %v459
        %545 = vmatprep.subr.bf16.mxu0 0
        %546 = vmatpush1.bf16.msra.mxu0 %v458
        %547 = vmatprep.subr.bf16.mxu0 0
        %548 = vmatpush2.bf16.msra.mxu0 0
        %549 = vmatprep.subr.bf16.mxu0 0
        %550 = vmatpush2.bf16.msra.mxu0 0
        %551 = vmatprep.subr.bf16.mxu0 0
        %552 = vmatpush2.bf16.msra.mxu0 0
        %553 = vmatprep.subr.bf16.mxu0 0
        %554 = vmatpush2.bf16.msra.mxu0 0
        %555 = vmatprep.subr.bf16.mxu0 0
        %556 = vmatpush2.bf16.msra.mxu0 0
        %557 = vmatprep.subr.bf16.mxu0 0
        %558 = vmatpush2.bf16.msra.mxu0 0
        %559 = vmatprep.subr.bf16.mxu0 0
        %560 = vmatpush2.bf16.msra.mxu0 0
        %561 = vmatprep.subr.bf16.mxu0 0
        %562 = vmatpush2.bf16.msra.mxu0 0
        %563 = vmatprep.mubr.bf16.mxu0 0
        %564 = vmatmul.mubr.bf16.gmra.mxu0 %v342
        %v565 = vpop.f32.mrf.mxu0
        %v566 = vadd.f32 %v525, %v565
        %v567 = vpop.f32.mrf.mxu0
        %v568 = vpop.f32.mrf.mxu0
        %v569 = vadd.f32 %v528, %v568
        %v570 = vpop.f32.mrf.mxu0
        %571 = vdwg.mxu0
        %v572 = vadd.f32 %v276, %v566
        %v573 = vadd.f32 %v277, %v569
        %574 = vst [vmem:[#allocation2] sm:$0xff] %v572
        %575 = vst [vmem:[#allocation2 + $0x8] sm:$0xff] %v573
        %p576 = scmp.eq.s32.totalorder %s28, 1
        // Predicated region
        $region45: #{tpu_custom_call.1} parent=31 // pred_check
          %p577 = pneg %p576
        $region46: #{tpu_custom_call.1} parent=31 // pred_check_branch
          %579 = sbr.rel (%p577) target = $region48
        $region47: #{tpu_custom_call.1} parent=31 // pred_region
          %v580 = vld [vmem:[#allocation2] sm:$0xff]
          %v581 = vld [vmem:[#allocation2 + $0x8] sm:$0xff]
          %v582 = vld [vmem:[%s267] sm:$0x1]
          %v584 = vlaneseq
          %v585 = vshrl.u32 %v584, 7
          %v586 = vsub.s32 0, %v585
          %v587 = vrot.slane %v582, %v586
          %v589 = vadd.f32 %v580, %v587
          %v590 = vadd.f32 %v581, %v587
          %591 = vst [vmem:[#allocation8] sm:$0xff] %v589
          %592 = vst [vmem:[#allocation8 + $0x8] sm:$0xff] %v590
        $region48: #{tpu_custom_call.1} parent=31 // pred_fallthru
          _
        // Predicated region
        $region49: #{tpu_custom_call.1} parent=31 // pred_check
          %p593 = pneg %p142
        $region50: #{tpu_custom_call.1} parent=31 // pred_check_branch
          %595 = sbr.rel (%p593) target = $region52
        $region51: #{tpu_custom_call.1} parent=31 // pred_region
          %s596 = smul.u32 2, %s26
          %s598 = ssub.s32 256, 256
          %599 = vsyncadd [#allocation5], %s598
          %s600 = sadd.s32 %s27, %s596
          %s601 = smul.addr %s600, 128
          %s602 = scalar_lea.hbm %s3, %s601
          %s603 = sshll.u32 [#allocation8], 4
          %s604 = int_to_ptr.vmem [resolvable:$true] %s603
          %609 = dma.vmem_to_hbm [thread:$0]  %s604, 256, %s602, [#allocation5], 128, 128, 8
        $region52: #{tpu_custom_call.1} parent=31 // pred_fallthru
          _
        // Predicated region
        $region53: #{tpu_custom_call.1} parent=31 // pred_check
          %p610 = pneg %p142
        $region54: #{tpu_custom_call.1} parent=31 // pred_check_branch
          %612 = sbr.rel (%p610) target = $region56
        $region55: #{tpu_custom_call.1} parent=31 // pred_region
          %613 = dma.done [#allocation5], 256
        $region56: #{tpu_custom_call.1} parent=31 // pred_fallthru
          _
      $region32: #{tpu_custom_call.1} parent=5 // pred_fallthru
        _
      %p614 = scmp.le.s32.totalorder 2, %s16
      // Predicated region
      $region57: #{tpu_custom_call.1} parent=5 // pred_check
        %p615 = pneg %p614
      $region58: #{tpu_custom_call.1} parent=5 // pred_check_branch
        %617 = sbr.rel (%p615) target = $region60
      $region59: #{tpu_custom_call.1} parent=5 // pred_region
        %s618 = ssub.s32 %s16, 2
      $region60: #{tpu_custom_call.1} parent=5 // pred_fallthru
        _
    $region6: #{tpu_custom_call.1} parent=1 // loop_footer
      %s20 = sadd.s32 1, %s16
    $region7: #{tpu_custom_call.1} parent=1 // loop_footer_branch
      %15 = sbr.rel target = $region3
    $region8: #{tpu_custom_call.1} parent=1 // loop_exit
      _
    %619 = vsyncpa [#allocation4], 1
    %s620 = scalar_lea.sflag [#allocation4], 1
    %621 = vsyncpa %s620, 1
    %622 = vsyncpa [#allocation7], 1
    %s623 = scalar_lea.sflag [#allocation7], 1
    %624 = vsyncpa %s623, 1
    %625 = vsyncpa [#allocation5], 1
    %s626 = scalar_lea.sflag [#allocation5], 1
    %627 = vsyncpa %s626, 1

</llo_original>
